<compile_context>
chip_gen: v7x
topology: tpu7x:2x2x1
jax: 0.10.0
libtpu: 0.0.40
codegen_flags: <defaults>
</compile_context>

<pallas_src>
import functools

import jax
import jax.numpy as jnp
from jax.experimental import pallas as pl
from jax.experimental.pallas import tpu as pltpu


def _round_up(x, m):
    return ((x + m - 1) // m) * m


def _pick_tk(d_pad, tk_max=1024):
    """Largest multiple of 128 <= tk_max that divides d_pad (d_pad % 128 == 0)."""
    tk = (min(tk_max, d_pad) // 128) * 128
    while d_pad % tk != 0:
        tk -= 128
    return tk


def _predict_kernel(x_ref, w_ref, b_ref, o_ref, *, tk, w_resident):
    """Fused linear + softmax(dim=1), K-tiled.

    x_ref: [TB, TK]        bf16 activation tile
    w_ref: [D_pad, C_pad]  (resident) or [TK, C_pad] (streamed) bf16 weights
    b_ref: [1,  C_pad]     f32 bias (padded class lanes = -1e30)
    o_ref: [TB, C_pad]     f32 output block, resident across the K axis;
                           used directly as the accumulator.
    """
    k = pl.program_id(1)

    @pl.when(k == 0)
    def _init():
        o_ref[...] = jnp.zeros_like(o_ref)

    if w_resident:
        kk = pl.multiple_of(k * tk, 128)
        w_tile = w_ref[pl.ds(kk, tk), :]
    else:
        w_tile = w_ref[...]

    o_ref[...] += jnp.dot(x_ref[...], w_tile, preferred_element_type=jnp.float32)

    @pl.when(k == pl.num_programs(1) - 1)
    def _finalize():
        # Bias added once in the epilogue; padded class lanes hold -1e30 so
        # exp underflows to exactly 0 there (safe in f32).
        logits = o_ref[...] + b_ref[...]
        m = jnp.max(logits, axis=-1, keepdims=True)
        e = jnp.exp(logits - m)
        # Exact divide (runs once per batch tile): rows sum to 1 to f32
        # precision, matching torch.softmax much more closely than the
        # approximate reciprocal did.
        o_ref[...] = e / jnp.sum(e, axis=-1, keepdims=True)


def pallas_predict(x_flat, w_pad, b_pad, *, num_classes, tb=512, tk_max=1024):
    """x_flat: [B, D] (any float dtype), w_pad: [D_pad, C_pad] bf16,
    b_pad: [1, C_pad] f32 -> softmax probabilities [B, num_classes] f32."""
    B, D = x_flat.shape
    D_pad, C_pad = w_pad.shape
    assert b_pad.shape == (1, C_pad)
    assert D <= D_pad and D_pad % 128 == 0 and C_pad % 128 == 0

    TK = _pick_tk(D_pad, tk_max)
    nk = D_pad // TK

    # Batch tiling: TB multiple of 8; keep >= 2 batch tiles when the batch is
    # big enough so both v7x TensorCores get work on the "parallel" axis.
    B8 = _round_up(B, 8)
    TB = min(tb, B8)
    if B8 // TB < 2 and B8 >= 16:
        TB = _round_up((B8 + 1) // 2, 8)
    B_pad = _round_up(B, TB)
    nb = B_pad // TB

    # Cast to bf16 first, pad after (half the bytes moved); with TK dividing
    # D_pad the only padding is the (cheap) bf16 one below.
    x_bf = x_flat.astype(jnp.bfloat16)
    if B_pad > B or D_pad > D:
        x_bf = jnp.pad(x_bf, ((0, B_pad - B), (0, D_pad - D)))

    # Keep W fully VMEM-resident (fetched once) when it fits comfortably even
    # on v7x (64 MiB VMEM); otherwise stream K tiles of it.
    w_bytes = D_pad * C_pad * 2
    w_resident = (2 * w_bytes) <= (12 * 1024 * 1024)

    if w_resident:
        w_spec = pl.BlockSpec((D_pad, C_pad), lambda i, k: (0, 0))
    else:
        w_spec = pl.BlockSpec((TK, C_pad), lambda i, k: (k, 0))

    # VMEM budget from the actual footprint (double-buffered tiles) + slack.
    est = (2 * TB * TK * 2                                     # x tiles (bf16)
           + (2 * w_bytes if w_resident else 2 * TK * C_pad * 2)
           + 2 * TB * C_pad * 4                                # out tiles (f32)
           + 2 * C_pad * 4                                     # bias
           + (2 << 20))                                        # slack
    vmem_limit = int(min(max(2 * est, 8 << 20), 32 << 20))

    kernel = functools.partial(_predict_kernel, tk=TK, w_resident=w_resident)

    out = pl.pallas_call(
        kernel,
        out_shape=jax.ShapeDtypeStruct((B_pad, C_pad), jnp.float32),
        grid_spec=pltpu.PrefetchScalarGridSpec(
            num_scalar_prefetch=0,
            grid=(nb, nk),
            in_specs=[
                pl.BlockSpec((TB, TK), lambda i, k: (i, k)),
                w_spec,
                pl.BlockSpec((1, C_pad), lambda i, k: (0, 0)),
            ],
            out_specs=pl.BlockSpec((TB, C_pad), lambda i, k: (i, 0)),
        ),
        compiler_params=pltpu.CompilerParams(
            dimension_semantics=("parallel", "arbitrary"),
            vmem_limit_bytes=vmem_limit,
        ),
    )(x_bf, w_pad, b_pad)

    return out[:B, :num_classes]


class GridContainerBase:
    """JAX/Pallas port of the PyTorch GridContainerBase."""

    def __init__(self, model_params, scale=2):
        assert scale >= 1 and isinstance(scale, int)
        self.scale = scale
        self.num_heads = scale * scale

        # Synthetic linear classifier standing in for the abstract `model`.
        w, b = model_params
        D, C = w.shape
        self._D = D
        self._C = C
        D_pad = _round_up(D, 128)
        C_pad = _round_up(C, 128)
        # Static params are padded/cast exactly once (off the predict() hot
        # path): bf16 weights, class dim padded lane-dense to 128; padded bias
        # lanes = -1e30 so padded classes carry zero softmax mass (f32-safe).
        self._w_pad = jnp.pad(w.astype(jnp.bfloat16),
                              ((0, D_pad - D), (0, C_pad - C)))
        self._b_pad = jnp.pad(b.astype(jnp.float32), (0, C_pad - C),
                              constant_values=-1e30).reshape(1, C_pad)

    def __call__(self, x, start_layer=None):
        return self.forward(x, start_layer)

    def forward(self, x, start_layer=None):
        # TODO(synk): the reference base class raises NotImplementedError here;
        # concrete subclasses dispatch into self.model.  We flatten NCHW ->
        # [B, D] for the synthetic linear model so predict() is runnable.
        B = x.shape[0]
        return x.reshape(B, -1)

    def get_intermediate_activations(self, x, output_head_idx=0, end_layer=None):
        raise NotImplementedError

    def predict(self, x, *args):
        """softmax(model(x), dim=1), computed in a single fused Pallas kernel."""
        x_flat = self.forward(x, *args) if args else self.forward(x)
        return pallas_predict(x_flat, self._w_pad, self._b_pad,
                              num_classes=self._C)


if __name__ == "__main__":
    # Small deterministic setup: NCHW input [2, 4, 16, 16], 10 classes.
    key = jax.random.PRNGKey(0)
    kx, kw, kb = jax.random.split(key, 3)

    B, Cin, H, W = 2, 4, 16, 16
    num_classes = 10
    D = Cin * H * W

    x = jax.random.normal(kx, (B, Cin, H, W), dtype=jnp.float32)
    w = jax.random.normal(kw, (D, num_classes), dtype=jnp.float32) * 0.02
    b = jax.random.normal(kb, (num_classes,), dtype=jnp.float32) * 0.1

    container = GridContainerBase(model_params=(w, b), scale=2)
    probs = jax.block_until_ready(container.predict(x))

    assert probs.shape == (B, num_classes)

    # sanity: rows of softmax sum to 1 (exact divide in the epilogue)
    row_sums = jnp.sum(probs, axis=1)
    assert bool(jnp.all(jnp.abs(row_sums - 1.0) < 1e-3)), row_sums

    # sanity vs plain-JAX f32 reference (kernel uses bf16 inputs -> loose tol)
    logits_ref = x.reshape(B, -1) @ w + b
    probs_ref = jax.nn.softmax(logits_ref, axis=1)
    max_err = float(jnp.max(jnp.abs(probs - probs_ref)))
    assert max_err < 5e-2, max_err

    print("KERNEL_OK")
</pallas_src>

<mosaic_0001>
module attributes {stable_mosaic.version = 11 : i64} {
  func.func @_predict_kernel(%arg0: i32, %arg1: i32, %arg2: memref<8x1024xbf16, #tpu.memory_space<vmem>>, %arg3: memref<1024x128xbf16, #tpu.memory_space<vmem>>, %arg4: memref<1x128xf32, #tpu.memory_space<vmem>>, %arg5: memref<8x128xf32, #tpu.memory_space<vmem>>) attributes {dimension_semantics = [#tpu.dimension_semantics<parallel>, #tpu.dimension_semantics<arbitrary>], iteration_bounds = array<i64: 1, 1>, scalar_prefetch = 0 : i64, scratch_operands = 0 : i64, tpu.core_type = #tpu.core_type<tc>, window_params = [{transform_indices = @transform_0, window_bounds = array<i64: 8, 1024>}, {pipeline_mode = #tpu.pipeline_mode<synchronous>, transform_indices = @transform_1, window_bounds = array<i64: 1024, 128>}, {pipeline_mode = #tpu.pipeline_mode<synchronous>, transform_indices = @transform_2, window_bounds = array<i64: 1, 128>}, {transform_indices = @transform_3, window_bounds = array<i64: 8, 128>}]} {
    %c0_i32 = arith.constant 0 : i32
    %0 = arith.cmpi eq, %arg1, %c0_i32 : i32
    %1 = arith.extui %0 : i1 to i32
    %c0_i32_0 = arith.constant 0 : i32
    %2 = arith.cmpi ne, %1, %c0_i32_0 : i32
    scf.if %2 {
      %cst_9 = arith.constant 0.000000e+00 : f32
      %15 = vector.broadcast %cst_9 : f32 to vector<8x128xf32>
      %c0_10 = arith.constant 0 : index
      %c0_11 = arith.constant 0 : index
      %16 = vector.load %arg5[%c0_10, %c0_11] : memref<8x128xf32, #tpu.memory_space<vmem>>, vector<8x128xf32>
      tpu.vector_store %arg5[%c0_10, %c0_11], %15 {strides = array<i32>} : memref<8x128xf32, #tpu.memory_space<vmem>>, vector<8x128xf32>,
    } else {
    }
    %c1024_i32 = arith.constant 1024 : i32
    %3 = arith.muli %arg1, %c1024_i32 : i32
    %4 = tpu.assume_multiple %3, 128 : i32
    %5 = arith.index_cast %4 : i32 to index
    %c0 = arith.constant 0 : index
    %6 = vector.load %arg3[%5, %c0] : memref<1024x128xbf16, #tpu.memory_space<vmem>>, vector<1024x128xbf16>
    %c0_1 = arith.constant 0 : index
    %c0_2 = arith.constant 0 : index
    %7 = vector.load %arg5[%c0_1, %c0_2] : memref<8x128xf32, #tpu.memory_space<vmem>>, vector<8x128xf32>
    %c0_3 = arith.constant 0 : index
    %c0_4 = arith.constant 0 : index
    %8 = vector.load %arg2[%c0_3, %c0_4] : memref<8x1024xbf16, #tpu.memory_space<vmem>>, vector<8x1024xbf16>
    %cst = arith.constant dense<0.000000e+00> : vector<8x128xf32>
    %9 = tpu.matmul %8, %6, %cst {dimension_numbers = #tpu.dot_dimension_numbers<[1], [0], [0], [1], [0, 0, 1, 1], [], []>} : vector<8x1024xbf16>, vector<1024x128xbf16>, vector<8x128xf32> -> vector<8x128xf32>
    %10 = arith.addf %7, %9 : vector<8x128xf32>
    %c0_5 = arith.constant 0 : index
    %c0_6 = arith.constant 0 : index
    %11 = vector.load %arg5[%c0_5, %c0_6] : memref<8x128xf32, #tpu.memory_space<vmem>>, vector<8x128xf32>
    tpu.vector_store %arg5[%c0_5, %c0_6], %10 {strides = array<i32>} : memref<8x128xf32, #tpu.memory_space<vmem>>, vector<8x128xf32>,
    %c0_i32_7 = arith.constant 0 : i32
    %12 = arith.cmpi eq, %arg1, %c0_i32_7 : i32
    %13 = arith.extui %12 : i1 to i32
    %c0_i32_8 = arith.constant 0 : i32
    %14 = arith.cmpi ne, %13, %c0_i32_8 : i32
    scf.if %14 {
      %c0_9 = arith.constant 0 : index
      %c0_10 = arith.constant 0 : index
      %15 = vector.load %arg5[%c0_9, %c0_10] : memref<8x128xf32, #tpu.memory_space<vmem>>, vector<8x128xf32>
      %c0_11 = arith.constant 0 : index
      %c0_12 = arith.constant 0 : index
      %16 = vector.load %arg4[%c0_11, %c0_12] : memref<1x128xf32, #tpu.memory_space<vmem>>, vector<1x128xf32>
      %17 = vector.broadcast %16 : vector<1x128xf32> to vector<8x128xf32>
      %18 = arith.addf %15, %17 : vector<8x128xf32>
      %cst_13 = arith.constant dense<0xFF800000> : vector<8xf32>
      %19 = vector.multi_reduction <maximumf>, %18, %cst_13 [1] : vector<8x128xf32> to vector<8xf32>
      %20 = vector.shape_cast %19 : vector<8xf32> to vector<8x1xf32>
      %21 = vector.broadcast %20 : vector<8x1xf32> to vector<8x128xf32>
      %22 = arith.subf %18, %21 : vector<8x128xf32>
      %23 = math.exp %22 : vector<8x128xf32>
      %cst_14 = arith.constant dense<0.000000e+00> : vector<8xf32>
      %24 = vector.multi_reduction <add>, %23, %cst_14 [1] : vector<8x128xf32> to vector<8xf32>
      %25 = vector.shape_cast %24 : vector<8xf32> to vector<8x1xf32>
      %26 = vector.broadcast %25 : vector<8x1xf32> to vector<8x128xf32>
      %27 = arith.divf %23, %26 : vector<8x128xf32>
      %c0_15 = arith.constant 0 : index
      %c0_16 = arith.constant 0 : index
      %28 = vector.load %arg5[%c0_15, %c0_16] : memref<8x128xf32, #tpu.memory_space<vmem>>, vector<8x128xf32>
      tpu.vector_store %arg5[%c0_15, %c0_16], %27 {strides = array<i32>} : memref<8x128xf32, #tpu.memory_space<vmem>>, vector<8x128xf32>,
    } else {
    }
    return
  }
  func.func @transform_0(%arg0: i32, %arg1: i32) -> (i32, i32) {
    %c0_i32 = arith.constant 0 : i32
    return %arg0, %arg1 : i32, i32
  }
  func.func @transform_1(%arg0: i32, %arg1: i32) -> (i32, i32) {
    %c0_i32 = arith.constant 0 : i32
    %c0_i32_0 = arith.constant 0 : i32
    %c0_i32_1 = arith.constant 0 : i32
    return %c0_i32, %c0_i32_0 : i32, i32
  }
  func.func @transform_2(%arg0: i32, %arg1: i32) -> (i32, i32) {
    %c0_i32 = arith.constant 0 : i32
    %c0_i32_0 = arith.constant 0 : i32
    %c0_i32_1 = arith.constant 0 : i32
    return %c0_i32, %c0_i32_0 : i32, i32
  }
  func.func @transform_3(%arg0: i32, %arg1: i32) -> (i32, i32) {
    %c0_i32 = arith.constant 0 : i32
    %c0_i32_0 = arith.constant 0 : i32
    return %arg0, %c0_i32 : i32, i32
  }
}

</mosaic_0001>

<llo_original>
// kernel: tpu_custom_call.1
$region0: #{tpu_custom_call.1}
  #allocation0 [shape = 'u32[]', space=smem, size = 0x4, offset = 0x4, fixed_abs, tag = 'smem constant byte address 0x4 - core index']
  #allocation1 [shape = 'u32[144,128]{1,0:T(1,128)}', space=vmem, size = 0x12000, scoped, tag = 'internal scratch']
  %s0 = inlined_call_operand.hbm [shape: bf16[8,1024], index: 0, kind: input, shape index: {}]
  %s1 = inlined_call_operand.hbm [shape: bf16[1024,128], index: 1, kind: input, shape index: {}]
  %s2 = inlined_call_operand.vmem [shape: f32[1,128], index: 2, kind: input, shape index: {}]
  %s3 = inlined_call_operand.hbm [shape: f32[8,128], index: 3, kind: output, shape index: {}]
  %s4 = sld [smem:[#allocation0]]
  $region38: #{tpu_custom_call.1} parent=0
    _
  %s6 = ssub.s32 1, %s4
  %s7 = scalar_select 0, %s6, %s4
  $region1: #{tpu_custom_call.1} parent=0
    #allocation2 [shape = 'u8[16384]{0}', space=vmem, size = 0x4000, scoped, tag = 'input window, operand 0, single buffered']
    #allocation3 [shape = 's32[1]{0}', space=sflag, size = 0x4, scoped, tag = 'scoped memory for tpu_custom_call.1']
    #allocation4 [shape = 's32[1]{0}', space=sflag, size = 0x4, scoped, tag = 'scoped memory for tpu_custom_call.1']
    #allocation5 [shape = 'u8[262144]{0}', space=vmem, size = 0x40000, scoped, tag = 'input window, operand 1, single buffered']
    #allocation6 [shape = 's32[1]{0}', space=sflag, size = 0x4, scoped, tag = 'scoped memory for tpu_custom_call.1']
    #allocation7 [shape = 'u8[4096]{0}', space=vmem, size = 0x1000, scoped, tag = 'output window, operand 0, single buffered']
    %8 = vsyncpa [#allocation3], 0
    %9 = vsyncpa [#allocation6], 0
    %10 = vsyncpa [#allocation4], 0
    // Predicated region
    $region2: #{tpu_custom_call.1} parent=1 // pred_check
      _
    $region3: #{tpu_custom_call.1} parent=1 // pred_check_branch
      %12 = sbr.rel (0) target = $region5
    $region4: #{tpu_custom_call.1} parent=1 // pred_region
      %s14 = ssub.s32 512, 512
      %15 = vsyncadd [#allocation3], %s14
      %s17 = sshll.u32 [#allocation2], 4
      %s18 = int_to_ptr.vmem [resolvable:$true] %s17
      %20 = dma.hbm_to_vmem [thread:$0]  %s0, 512, %s18, [#allocation3]
    $region5: #{tpu_custom_call.1} parent=1 // pred_fallthru
      _
    // Predicated region
    $region6: #{tpu_custom_call.1} parent=1 // pred_check
      _
    $region7: #{tpu_custom_call.1} parent=1 // pred_check_branch
      %22 = sbr.rel (0) target = $region9
    $region8: #{tpu_custom_call.1} parent=1 // pred_region
      %s24 = ssub.s32 8192, 8192
      %25 = vsyncadd [#allocation6], %s24
      %s26 = sshll.u32 [#allocation5], 4
      %s27 = int_to_ptr.vmem [resolvable:$true] %s26
      %32 = dma.hbm_to_vmem [thread:$0]  %s1, 8192, %s27, [#allocation6], 64, 64, 4
    $region9: #{tpu_custom_call.1} parent=1 // pred_fallthru
      _
    // Predicated region
    $region10: #{tpu_custom_call.1} parent=1 // pred_check
      _
    $region11: #{tpu_custom_call.1} parent=1 // pred_check_branch
      %34 = sbr.rel (0) target = $region13
    $region12: #{tpu_custom_call.1} parent=1 // pred_region
      _
    $region13: #{tpu_custom_call.1} parent=1 // pred_fallthru
      _
    // Predicated region
    $region14: #{tpu_custom_call.1} parent=1 // pred_check
      _
    $region15: #{tpu_custom_call.1} parent=1 // pred_check_branch
      %36 = sbr.rel (0) target = $region17
    $region16: #{tpu_custom_call.1} parent=1 // pred_region
      %37 = dma.done [#allocation3], 512
    $region17: #{tpu_custom_call.1} parent=1 // pred_fallthru
      _
    // Predicated region
    $region18: #{tpu_custom_call.1} parent=1 // pred_check
      _
    $region19: #{tpu_custom_call.1} parent=1 // pred_check_branch
      %39 = sbr.rel (0) target = $region21
    $region20: #{tpu_custom_call.1} parent=1 // pred_region
      %40 = dma.done [#allocation6], 8192
    $region21: #{tpu_custom_call.1} parent=1 // pred_fallthru
      _
    %p42 = scmp.eq.s32.totalorder 0, 0
    // Predicated region
    $region22: #{tpu_custom_call.1} parent=1 // pred_check
      %p43 = pneg %p42
    $region23: #{tpu_custom_call.1} parent=1 // pred_check_branch
      %45 = sbr.rel (%p43) target = $region25
    $region24: #{tpu_custom_call.1} parent=1 // pred_region
      %46 = vst [vmem:[#allocation7] sm:$0xff] 0.0
    $region25: #{tpu_custom_call.1} parent=1 // pred_fallthru
      _
    %s47 = smul.u32 0, 1024
    %s48 = sshra.s32 %s47, 3
    %s49 = sand.u32 %s47, 7
    %s50 = smul.addr %s48, 4
    %s51 = scalar_lea.vmem [#allocation5], %s50
    %v52 = vld [vmem:[%s51] sm:$0xf]
    %v53 = vld [vmem:[%s51 + $0x4] sm:$0xf]
    %v54 = vld [vmem:[%s51 + $0x8] sm:$0xf]
    %v55 = vld [vmem:[%s51 + $0xc] sm:$0xf]
    %v56 = vld [vmem:[%s51 + $0x10] sm:$0xf]
    %v57 = vld [vmem:[%s51 + $0x14] sm:$0xf]
    %v58 = vld [vmem:[%s51 + $0x18] sm:$0xf]
    %v59 = vld [vmem:[%s51 + $0x1c] sm:$0xf]
    %v60 = vld [vmem:[%s51 + $0x20] sm:$0xf]
    %v61 = vld [vmem:[%s51 + $0x24] sm:$0xf]
    %v62 = vld [vmem:[%s51 + $0x28] sm:$0xf]
    %v63 = vld [vmem:[%s51 + $0x2c] sm:$0xf]
    %v64 = vld [vmem:[%s51 + $0x30] sm:$0xf]
    %v65 = vld [vmem:[%s51 + $0x34] sm:$0xf]
    %v66 = vld [vmem:[%s51 + $0x38] sm:$0xf]
    %v67 = vld [vmem:[%s51 + $0x3c] sm:$0xf]
    %v68 = vld [vmem:[%s51 + $0x40] sm:$0xf]
    %v69 = vld [vmem:[%s51 + $0x44] sm:$0xf]
    %v70 = vld [vmem:[%s51 + $0x48] sm:$0xf]
    %v71 = vld [vmem:[%s51 + $0x4c] sm:$0xf]
    %v72 = vld [vmem:[%s51 + $0x50] sm:$0xf]
    %v73 = vld [vmem:[%s51 + $0x54] sm:$0xf]
    %v74 = vld [vmem:[%s51 + $0x58] sm:$0xf]
    %v75 = vld [vmem:[%s51 + $0x5c] sm:$0xf]
    %v76 = vld [vmem:[%s51 + $0x60] sm:$0xf]
    %v77 = vld [vmem:[%s51 + $0x64] sm:$0xf]
    %v78 = vld [vmem:[%s51 + $0x68] sm:$0xf]
    %v79 = vld [vmem:[%s51 + $0x6c] sm:$0xf]
    %v80 = vld [vmem:[%s51 + $0x70] sm:$0xf]
    %v81 = vld [vmem:[%s51 + $0x74] sm:$0xf]
    %v82 = vld [vmem:[%s51 + $0x78] sm:$0xf]
    %v83 = vld [vmem:[%s51 + $0x7c] sm:$0xf]
    %v84 = vld [vmem:[%s51 + $0x80] sm:$0xf]
    %v85 = vld [vmem:[%s51 + $0x84] sm:$0xf]
    %v86 = vld [vmem:[%s51 + $0x88] sm:$0xf]
    %v87 = vld [vmem:[%s51 + $0x8c] sm:$0xf]
    %v88 = vld [vmem:[%s51 + $0x90] sm:$0xf]
    %v89 = vld [vmem:[%s51 + $0x94] sm:$0xf]
    %v90 = vld [vmem:[%s51 + $0x98] sm:$0xf]
    %v91 = vld [vmem:[%s51 + $0x9c] sm:$0xf]
    %v92 = vld [vmem:[%s51 + $0xa0] sm:$0xf]
    %v93 = vld [vmem:[%s51 + $0xa4] sm:$0xf]
    %v94 = vld [vmem:[%s51 + $0xa8] sm:$0xf]
    %v95 = vld [vmem:[%s51 + $0xac] sm:$0xf]
    %v96 = vld [vmem:[%s51 + $0xb0] sm:$0xf]
    %v97 = vld [vmem:[%s51 + $0xb4] sm:$0xf]
    %v98 = vld [vmem:[%s51 + $0xb8] sm:$0xf]
    %v99 = vld [vmem:[%s51 + $0xbc] sm:$0xf]
    %v100 = vld [vmem:[%s51 + $0xc0] sm:$0xf]
    %v101 = vld [vmem:[%s51 + $0xc4] sm:$0xf]
    %v102 = vld [vmem:[%s51 + $0xc8] sm:$0xf]
    %v103 = vld [vmem:[%s51 + $0xcc] sm:$0xf]
    %v104 = vld [vmem:[%s51 + $0xd0] sm:$0xf]
    %v105 = vld [vmem:[%s51 + $0xd4] sm:$0xf]
    %v106 = vld [vmem:[%s51 + $0xd8] sm:$0xf]
    %v107 = vld [vmem:[%s51 + $0xdc] sm:$0xf]
    %v108 = vld [vmem:[%s51 + $0xe0] sm:$0xf]
    %v109 = vld [vmem:[%s51 + $0xe4] sm:$0xf]
    %v110 = vld [vmem:[%s51 + $0xe8] sm:$0xf]
    %v111 = vld [vmem:[%s51 + $0xec] sm:$0xf]
    %v112 = vld [vmem:[%s51 + $0xf0] sm:$0xf]
    %v113 = vld [vmem:[%s51 + $0xf4] sm:$0xf]
    %v114 = vld [vmem:[%s51 + $0xf8] sm:$0xf]
    %v115 = vld [vmem:[%s51 + $0xfc] sm:$0xf]
    %v116 = vld [vmem:[%s51 + $0x100] sm:$0xf]
    %v117 = vld [vmem:[%s51 + $0x104] sm:$0xf]
    %v118 = vld [vmem:[%s51 + $0x108] sm:$0xf]
    %v119 = vld [vmem:[%s51 + $0x10c] sm:$0xf]
    %v120 = vld [vmem:[%s51 + $0x110] sm:$0xf]
    %v121 = vld [vmem:[%s51 + $0x114] sm:$0xf]
    %v122 = vld [vmem:[%s51 + $0x118] sm:$0xf]
    %v123 = vld [vmem:[%s51 + $0x11c] sm:$0xf]
    %v124 = vld [vmem:[%s51 + $0x120] sm:$0xf]
    %v125 = vld [vmem:[%s51 + $0x124] sm:$0xf]
    %v126 = vld [vmem:[%s51 + $0x128] sm:$0xf]
    %v127 = vld [vmem:[%s51 + $0x12c] sm:$0xf]
    %v128 = vld [vmem:[%s51 + $0x130] sm:$0xf]
    %v129 = vld [vmem:[%s51 + $0x134] sm:$0xf]
    %v130 = vld [vmem:[%s51 + $0x138] sm:$0xf]
    %v131 = vld [vmem:[%s51 + $0x13c] sm:$0xf]
    %v132 = vld [vmem:[%s51 + $0x140] sm:$0xf]
    %v133 = vld [vmem:[%s51 + $0x144] sm:$0xf]
    %v134 = vld [vmem:[%s51 + $0x148] sm:$0xf]
    %v135 = vld [vmem:[%s51 + $0x14c] sm:$0xf]
    %v136 = vld [vmem:[%s51 + $0x150] sm:$0xf]
    %v137 = vld [vmem:[%s51 + $0x154] sm:$0xf]
    %v138 = vld [vmem:[%s51 + $0x158] sm:$0xf]
    %v139 = vld [vmem:[%s51 + $0x15c] sm:$0xf]
    %v140 = vld [vmem:[%s51 + $0x160] sm:$0xf]
    %v141 = vld [vmem:[%s51 + $0x164] sm:$0xf]
    %v142 = vld [vmem:[%s51 + $0x168] sm:$0xf]
    %v143 = vld [vmem:[%s51 + $0x16c] sm:$0xf]
    %v144 = vld [vmem:[%s51 + $0x170] sm:$0xf]
    %v145 = vld [vmem:[%s51 + $0x174] sm:$0xf]
    %v146 = vld [vmem:[%s51 + $0x178] sm:$0xf]
    %v147 = vld [vmem:[%s51 + $0x17c] sm:$0xf]
    %v148 = vld [vmem:[%s51 + $0x180] sm:$0xf]
    %v149 = vld [vmem:[%s51 + $0x184] sm:$0xf]
    %v150 = vld [vmem:[%s51 + $0x188] sm:$0xf]
    %v151 = vld [vmem:[%s51 + $0x18c] sm:$0xf]
    %v152 = vld [vmem:[%s51 + $0x190] sm:$0xf]
    %v153 = vld [vmem:[%s51 + $0x194] sm:$0xf]
    %v154 = vld [vmem:[%s51 + $0x198] sm:$0xf]
    %v155 = vld [vmem:[%s51 + $0x19c] sm:$0xf]
    %v156 = vld [vmem:[%s51 + $0x1a0] sm:$0xf]
    %v157 = vld [vmem:[%s51 + $0x1a4] sm:$0xf]
    %v158 = vld [vmem:[%s51 + $0x1a8] sm:$0xf]
    %v159 = vld [vmem:[%s51 + $0x1ac] sm:$0xf]
    %v160 = vld [vmem:[%s51 + $0x1b0] sm:$0xf]
    %v161 = vld [vmem:[%s51 + $0x1b4] sm:$0xf]
    %v162 = vld [vmem:[%s51 + $0x1b8] sm:$0xf]
    %v163 = vld [vmem:[%s51 + $0x1bc] sm:$0xf]
    %v164 = vld [vmem:[%s51 + $0x1c0] sm:$0xf]
    %v165 = vld [vmem:[%s51 + $0x1c4] sm:$0xf]
    %v166 = vld [vmem:[%s51 + $0x1c8] sm:$0xf]
    %v167 = vld [vmem:[%s51 + $0x1cc] sm:$0xf]
    %v168 = vld [vmem:[%s51 + $0x1d0] sm:$0xf]
    %v169 = vld [vmem:[%s51 + $0x1d4] sm:$0xf]
    %v170 = vld [vmem:[%s51 + $0x1d8] sm:$0xf]
    %v171 = vld [vmem:[%s51 + $0x1dc] sm:$0xf]
    %v172 = vld [vmem:[%s51 + $0x1e0] sm:$0xf]
    %v173 = vld [vmem:[%s51 + $0x1e4] sm:$0xf]
    %v174 = vld [vmem:[%s51 + $0x1e8] sm:$0xf]
    %v175 = vld [vmem:[%s51 + $0x1ec] sm:$0xf]
    %v176 = vld [vmem:[%s51 + $0x1f0] sm:$0xf]
    %v177 = vld [vmem:[%s51 + $0x1f4] sm:$0xf]
    %v178 = vld [vmem:[%s51 + $0x1f8] sm:$0xf]
    %v179 = vld [vmem:[%s51 + $0x1fc] sm:$0xf]
    %v180 = vld [vmem:[#allocation7] sm:$0xff]
    %v181 = vld [vmem:[#allocation2] sm:$0xff]
    %v182 = vld [vmem:[#allocation2 + $0x8] sm:$0xff]
    %v183 = vld [vmem:[#allocation2 + $0x10] sm:$0xff]
    %v184 = vld [vmem:[#allocation2 + $0x18] sm:$0xff]
    %v189 = vunpack.c.l.b16 %v181
    %v190 = vunpack.c.h.b16 %v181
    %v191 = vunpack.c.l.b16 %v182
    %v192 = vunpack.c.h.b16 %v182
    %v193 = vunpack.c.l.b16 %v183
    %v194 = vunpack.c.h.b16 %v183
    %v195 = vunpack.c.l.b16 %v184
    %v196 = vunpack.c.h.b16 %v184
    %v197 = vpack.c.b16 %v189, %v189
    %v198 = vpack.c.b16 %v190, %v190
    %v199 = vpack.c.b16 %v191, %v191
    %v200 = vpack.c.b16 %v192, %v192
    %v201 = vpack.c.b16 %v193, %v193
    %v202 = vpack.c.b16 %v194, %v194
    %v203 = vpack.c.b16 %v195, %v195
    %v204 = vpack.c.b16 %v196, %v196
    %v341 = vunpack.c.l.b16 %v52
    %v342 = vunpack.c.l.b16 %v53
    %v343 = vunpack.c.l.b16 %v54
    %v344 = vunpack.c.l.b16 %v55
    %v345 = vunpack.c.l.b16 %v56
    %v346 = vunpack.c.l.b16 %v57
    %v347 = vunpack.c.l.b16 %v58
    %v348 = vunpack.c.l.b16 %v59
    %v349 = vunpack.c.l.b16 %v60
    %v350 = vunpack.c.l.b16 %v61
    %v351 = vunpack.c.l.b16 %v62
    %v352 = vunpack.c.l.b16 %v63
    %v353 = vunpack.c.l.b16 %v64
    %v354 = vunpack.c.l.b16 %v65
    %v355 = vunpack.c.l.b16 %v66
    %v356 = vunpack.c.l.b16 %v67
    %v357 = vunpack.c.l.b16 %v68
    %v358 = vunpack.c.l.b16 %v69
    %v359 = vunpack.c.l.b16 %v70
    %v360 = vunpack.c.l.b16 %v71
    %v361 = vunpack.c.l.b16 %v72
    %v362 = vunpack.c.l.b16 %v73
    %v363 = vunpack.c.l.b16 %v74
    %v364 = vunpack.c.l.b16 %v75
    %v365 = vunpack.c.l.b16 %v76
    %v366 = vunpack.c.l.b16 %v77
    %v367 = vunpack.c.l.b16 %v78
    %v368 = vunpack.c.l.b16 %v79
    %v369 = vunpack.c.l.b16 %v80
    %v370 = vunpack.c.l.b16 %v81
    %v371 = vunpack.c.l.b16 %v82
    %v372 = vunpack.c.l.b16 %v83
    %v373 = vunpack.c.l.b16 %v84
    %v374 = vunpack.c.l.b16 %v85
    %v375 = vunpack.c.l.b16 %v86
    %v376 = vunpack.c.l.b16 %v87
    %v377 = vunpack.c.l.b16 %v88
    %v378 = vunpack.c.l.b16 %v89
    %v379 = vunpack.c.l.b16 %v90
    %v380 = vunpack.c.l.b16 %v91
    %v381 = vunpack.c.l.b16 %v92
    %v382 = vunpack.c.l.b16 %v93
    %v383 = vunpack.c.l.b16 %v94
    %v384 = vunpack.c.l.b16 %v95
    %v385 = vunpack.c.l.b16 %v96
    %v386 = vunpack.c.l.b16 %v97
    %v387 = vunpack.c.l.b16 %v98
    %v388 = vunpack.c.l.b16 %v99
    %v389 = vunpack.c.l.b16 %v100
    %v390 = vunpack.c.l.b16 %v101
    %v391 = vunpack.c.l.b16 %v102
    %v392 = vunpack.c.l.b16 %v103
    %v393 = vunpack.c.l.b16 %v104
    %v394 = vunpack.c.l.b16 %v105
    %v395 = vunpack.c.l.b16 %v106
    %v396 = vunpack.c.l.b16 %v107
    %v397 = vunpack.c.l.b16 %v108
    %v398 = vunpack.c.l.b16 %v109
    %v399 = vunpack.c.l.b16 %v110
    %v400 = vunpack.c.l.b16 %v111
    %v401 = vunpack.c.l.b16 %v112
    %v402 = vunpack.c.l.b16 %v113
    %v403 = vunpack.c.l.b16 %v114
    %v404 = vunpack.c.l.b16 %v115
    %v405 = vunpack.c.l.b16 %v116
    %v406 = vunpack.c.l.b16 %v117
    %v407 = vunpack.c.l.b16 %v118
    %v408 = vunpack.c.l.b16 %v119
    %v409 = vunpack.c.l.b16 %v120
    %v410 = vunpack.c.l.b16 %v121
    %v411 = vunpack.c.l.b16 %v122
    %v412 = vunpack.c.l.b16 %v123
    %v413 = vunpack.c.l.b16 %v124
    %v414 = vunpack.c.l.b16 %v125
    %v415 = vunpack.c.l.b16 %v126
    %v416 = vunpack.c.l.b16 %v127
    %v417 = vunpack.c.l.b16 %v128
    %v418 = vunpack.c.l.b16 %v129
    %v419 = vunpack.c.l.b16 %v130
    %v420 = vunpack.c.l.b16 %v131
    %v421 = vunpack.c.l.b16 %v132
    %v422 = vunpack.c.l.b16 %v133
    %v423 = vunpack.c.l.b16 %v134
    %v424 = vunpack.c.l.b16 %v135
    %v425 = vunpack.c.l.b16 %v136
    %v426 = vunpack.c.l.b16 %v137
    %v427 = vunpack.c.l.b16 %v138
    %v428 = vunpack.c.l.b16 %v139
    %v429 = vunpack.c.l.b16 %v140
    %v430 = vunpack.c.l.b16 %v141
    %v431 = vunpack.c.l.b16 %v142
    %v432 = vunpack.c.l.b16 %v143
    %v433 = vunpack.c.l.b16 %v144
    %v434 = vunpack.c.l.b16 %v145
    %v435 = vunpack.c.l.b16 %v146
    %v436 = vunpack.c.l.b16 %v147
    %v437 = vunpack.c.l.b16 %v148
    %v438 = vunpack.c.l.b16 %v149
    %v439 = vunpack.c.l.b16 %v150
    %v440 = vunpack.c.l.b16 %v151
    %v441 = vunpack.c.l.b16 %v152
    %v442 = vunpack.c.l.b16 %v153
    %v443 = vunpack.c.l.b16 %v154
    %v444 = vunpack.c.l.b16 %v155
    %v445 = vunpack.c.l.b16 %v156
    %v446 = vunpack.c.l.b16 %v157
    %v447 = vunpack.c.l.b16 %v158
    %v448 = vunpack.c.l.b16 %v159
    %v449 = vunpack.c.l.b16 %v160
    %v450 = vunpack.c.l.b16 %v161
    %v451 = vunpack.c.l.b16 %v162
    %v452 = vunpack.c.l.b16 %v163
    %v453 = vunpack.c.l.b16 %v164
    %v454 = vunpack.c.l.b16 %v165
    %v455 = vunpack.c.l.b16 %v166
    %v456 = vunpack.c.l.b16 %v167
    %v457 = vunpack.c.l.b16 %v168
    %v458 = vunpack.c.l.b16 %v169
    %v459 = vunpack.c.l.b16 %v170
    %v460 = vunpack.c.l.b16 %v171
    %v461 = vunpack.c.l.b16 %v172
    %v462 = vunpack.c.l.b16 %v173
    %v463 = vunpack.c.l.b16 %v174
    %v464 = vunpack.c.l.b16 %v175
    %v465 = vunpack.c.l.b16 %v176
    %v466 = vunpack.c.l.b16 %v177
    %v467 = vunpack.c.l.b16 %v178
    %v468 = vunpack.c.l.b16 %v179
    %v469 = vpack.c.b16 %v342, %v341
    %v470 = vpack.c.b16 %v344, %v343
    %v471 = vpack.c.b16 %v346, %v345
    %v472 = vpack.c.b16 %v348, %v347
    %v473 = vpack.c.b16 %v350, %v349
    %v474 = vpack.c.b16 %v352, %v351
    %v475 = vpack.c.b16 %v354, %v353
    %v476 = vpack.c.b16 %v356, %v355
    %v477 = vpack.c.b16 %v358, %v357
    %v478 = vpack.c.b16 %v360, %v359
    %v479 = vpack.c.b16 %v362, %v361
    %v480 = vpack.c.b16 %v364, %v363
    %v481 = vpack.c.b16 %v366, %v365
    %v482 = vpack.c.b16 %v368, %v367
    %v483 = vpack.c.b16 %v370, %v369
    %v484 = vpack.c.b16 %v372, %v371
    %v485 = vpack.c.b16 %v374, %v373
    %v486 = vpack.c.b16 %v376, %v375
    %v487 = vpack.c.b16 %v378, %v377
    %v488 = vpack.c.b16 %v380, %v379
    %v489 = vpack.c.b16 %v382, %v381
    %v490 = vpack.c.b16 %v384, %v383
    %v491 = vpack.c.b16 %v386, %v385
    %v492 = vpack.c.b16 %v388, %v387
    %v493 = vpack.c.b16 %v390, %v389
    %v494 = vpack.c.b16 %v392, %v391
    %v495 = vpack.c.b16 %v394, %v393
    %v496 = vpack.c.b16 %v396, %v395
    %v497 = vpack.c.b16 %v398, %v397
    %v498 = vpack.c.b16 %v400, %v399
    %v499 = vpack.c.b16 %v402, %v401
    %v500 = vpack.c.b16 %v404, %v403
    %v501 = vpack.c.b16 %v406, %v405
    %v502 = vpack.c.b16 %v408, %v407
    %v503 = vpack.c.b16 %v410, %v409
    %v504 = vpack.c.b16 %v412, %v411
    %v505 = vpack.c.b16 %v414, %v413
    %v506 = vpack.c.b16 %v416, %v415
    %v507 = vpack.c.b16 %v418, %v417
    %v508 = vpack.c.b16 %v420, %v419
    %v509 = vpack.c.b16 %v422, %v421
    %v510 = vpack.c.b16 %v424, %v423
    %v511 = vpack.c.b16 %v426, %v425
    %v512 = vpack.c.b16 %v428, %v427
    %v513 = vpack.c.b16 %v430, %v429
    %v514 = vpack.c.b16 %v432, %v431
    %v515 = vpack.c.b16 %v434, %v433
    %v516 = vpack.c.b16 %v436, %v435
    %v517 = vpack.c.b16 %v438, %v437
    %v518 = vpack.c.b16 %v440, %v439
    %v519 = vpack.c.b16 %v442, %v441
    %v520 = vpack.c.b16 %v444, %v443
    %v521 = vpack.c.b16 %v446, %v445
    %v522 = vpack.c.b16 %v448, %v447
    %v523 = vpack.c.b16 %v450, %v449
    %v524 = vpack.c.b16 %v452, %v451
    %v525 = vpack.c.b16 %v454, %v453
    %v526 = vpack.c.b16 %v456, %v455
    %v527 = vpack.c.b16 %v458, %v457
    %v528 = vpack.c.b16 %v460, %v459
    %v529 = vpack.c.b16 %v462, %v461
    %v530 = vpack.c.b16 %v464, %v463
    %v531 = vpack.c.b16 %v466, %v465
    %v532 = vpack.c.b16 %v468, %v467
    %597 = vmatprep.subr.bf16.mxu0 0
    %598 = vmatpush1.bf16.msra.mxu0 %v469
    %599 = vmatprep.subr.bf16.mxu0 0
    %600 = vmatpush1.bf16.msra.mxu0 %v470
    %601 = vmatprep.subr.bf16.mxu0 0
    %602 = vmatpush1.bf16.msra.mxu0 %v471
    %603 = vmatprep.subr.bf16.mxu0 0
    %604 = vmatpush1.bf16.msra.mxu0 %v472
    %605 = vmatprep.subr.bf16.mxu0 0
    %606 = vmatpush1.bf16.msra.mxu0 %v473
    %607 = vmatprep.subr.bf16.mxu0 0
    %608 = vmatpush1.bf16.msra.mxu0 %v474
    %609 = vmatprep.subr.bf16.mxu0 0
    %610 = vmatpush1.bf16.msra.mxu0 %v475
    %611 = vmatprep.subr.bf16.mxu0 0
    %612 = vmatpush1.bf16.msra.mxu0 %v476
    %613 = vmatprep.subr.bf16.mxu0 0
    %614 = vmatpush1.bf16.msra.mxu0 %v477
    %615 = vmatprep.subr.bf16.mxu0 0
    %616 = vmatpush1.bf16.msra.mxu0 %v478
    %617 = vmatprep.subr.bf16.mxu0 0
    %618 = vmatpush1.bf16.msra.mxu0 %v479
    %619 = vmatprep.subr.bf16.mxu0 0
    %620 = vmatpush1.bf16.msra.mxu0 %v480
    %621 = vmatprep.subr.bf16.mxu0 0
    %622 = vmatpush1.bf16.msra.mxu0 %v481
    %623 = vmatprep.subr.bf16.mxu0 0
    %624 = vmatpush1.bf16.msra.mxu0 %v482
    %625 = vmatprep.subr.bf16.mxu0 0
    %626 = vmatpush1.bf16.msra.mxu0 %v483
    %627 = vmatprep.subr.bf16.mxu0 0
    %628 = vmatpush1.bf16.msra.mxu0 %v484
    %629 = vmatprep.mubr.bf16.mxu0 %v198
    %630 = vmatmul.mubr.bf16.gmra.mrb[0].mxu0 %v197
    %v631 = vpop.f32.mrb[0].mxu0
    %v632 = vadd.f32 0.0, %v631
    %v633 = vpop.f32.mrb[0].mxu0
    %v634 = vpop.f32.mrb[0].mxu0
    %v635 = vpop.f32.mrb[0].mxu0
    %636 = vdwg.mxu0
    %637 = vmatprep.subr.bf16.mxu0 0
    %638 = vmatpush1.bf16.msra.mxu0 %v485
    %639 = vmatprep.subr.bf16.mxu0 0
    %640 = vmatpush1.bf16.msra.mxu0 %v486
    %641 = vmatprep.subr.bf16.mxu0 0
    %642 = vmatpush1.bf16.msra.mxu0 %v487
    %643 = vmatprep.subr.bf16.mxu0 0
    %644 = vmatpush1.bf16.msra.mxu0 %v488
    %645 = vmatprep.subr.bf16.mxu0 0
    %646 = vmatpush1.bf16.msra.mxu0 %v489
    %647 = vmatprep.subr.bf16.mxu0 0
    %648 = vmatpush1.bf16.msra.mxu0 %v490
    %649 = vmatprep.subr.bf16.mxu0 0
    %650 = vmatpush1.bf16.msra.mxu0 %v491
    %651 = vmatprep.subr.bf16.mxu0 0
    %652 = vmatpush1.bf16.msra.mxu0 %v492
    %653 = vmatprep.subr.bf16.mxu0 0
    %654 = vmatpush1.bf16.msra.mxu0 %v493
    %655 = vmatprep.subr.bf16.mxu0 0
    %656 = vmatpush1.bf16.msra.mxu0 %v494
    %657 = vmatprep.subr.bf16.mxu0 0
    %658 = vmatpush1.bf16.msra.mxu0 %v495
    %659 = vmatprep.subr.bf16.mxu0 0
    %660 = vmatpush1.bf16.msra.mxu0 %v496
    %661 = vmatprep.subr.bf16.mxu0 0
    %662 = vmatpush1.bf16.msra.mxu0 %v497
    %663 = vmatprep.subr.bf16.mxu0 0
    %664 = vmatpush1.bf16.msra.mxu0 %v498
    %665 = vmatprep.subr.bf16.mxu0 0
    %666 = vmatpush1.bf16.msra.mxu0 %v499
    %667 = vmatprep.subr.bf16.mxu0 0
    %668 = vmatpush1.bf16.msra.mxu0 %v500
    %669 = vmatprep.mubr.bf16.mxu0 %v200
    %670 = vmatmul.mubr.bf16.gmra.mrb[0].mxu0 %v199
    %v671 = vpop.f32.mrb[0].mxu0
    %v672 = vadd.f32 %v632, %v671
    %v673 = vpop.f32.mrb[0].mxu0
    %v674 = vpop.f32.mrb[0].mxu0
    %v675 = vpop.f32.mrb[0].mxu0
    %676 = vdwg.mxu0
    %677 = vmatprep.subr.bf16.mxu0 0
    %678 = vmatpush1.bf16.msra.mxu0 %v501
    %679 = vmatprep.subr.bf16.mxu0 0
    %680 = vmatpush1.bf16.msra.mxu0 %v502
    %681 = vmatprep.subr.bf16.mxu0 0
    %682 = vmatpush1.bf16.msra.mxu0 %v503
    %683 = vmatprep.subr.bf16.mxu0 0
    %684 = vmatpush1.bf16.msra.mxu0 %v504
    %685 = vmatprep.subr.bf16.mxu0 0
    %686 = vmatpush1.bf16.msra.mxu0 %v505
    %687 = vmatprep.subr.bf16.mxu0 0
    %688 = vmatpush1.bf16.msra.mxu0 %v506
    %689 = vmatprep.subr.bf16.mxu0 0
    %690 = vmatpush1.bf16.msra.mxu0 %v507
    %691 = vmatprep.subr.bf16.mxu0 0
    %692 = vmatpush1.bf16.msra.mxu0 %v508
    %693 = vmatprep.subr.bf16.mxu0 0
    %694 = vmatpush1.bf16.msra.mxu0 %v509
    %695 = vmatprep.subr.bf16.mxu0 0
    %696 = vmatpush1.bf16.msra.mxu0 %v510
    %697 = vmatprep.subr.bf16.mxu0 0
    %698 = vmatpush1.bf16.msra.mxu0 %v511
    %699 = vmatprep.subr.bf16.mxu0 0
    %700 = vmatpush1.bf16.msra.mxu0 %v512
    %701 = vmatprep.subr.bf16.mxu0 0
    %702 = vmatpush1.bf16.msra.mxu0 %v513
    %703 = vmatprep.subr.bf16.mxu0 0
    %704 = vmatpush1.bf16.msra.mxu0 %v514
    %705 = vmatprep.subr.bf16.mxu0 0
    %706 = vmatpush1.bf16.msra.mxu0 %v515
    %707 = vmatprep.subr.bf16.mxu0 0
    %708 = vmatpush1.bf16.msra.mxu0 %v516
    %709 = vmatprep.mubr.bf16.mxu0 %v202
    %710 = vmatmul.mubr.bf16.gmra.mrb[0].mxu0 %v201
    %v711 = vpop.f32.mrb[0].mxu0
    %v712 = vadd.f32 %v672, %v711
    %v713 = vpop.f32.mrb[0].mxu0
    %v714 = vpop.f32.mrb[0].mxu0
    %v715 = vpop.f32.mrb[0].mxu0
    %716 = vdwg.mxu0
    %717 = vmatprep.subr.bf16.mxu0 0
    %718 = vmatpush1.bf16.msra.mxu0 %v517
    %719 = vmatprep.subr.bf16.mxu0 0
    %720 = vmatpush1.bf16.msra.mxu0 %v518
    %721 = vmatprep.subr.bf16.mxu0 0
    %722 = vmatpush1.bf16.msra.mxu0 %v519
    %723 = vmatprep.subr.bf16.mxu0 0
    %724 = vmatpush1.bf16.msra.mxu0 %v520
    %725 = vmatprep.subr.bf16.mxu0 0
    %726 = vmatpush1.bf16.msra.mxu0 %v521
    %727 = vmatprep.subr.bf16.mxu0 0
    %728 = vmatpush1.bf16.msra.mxu0 %v522
    %729 = vmatprep.subr.bf16.mxu0 0
    %730 = vmatpush1.bf16.msra.mxu0 %v523
    %731 = vmatprep.subr.bf16.mxu0 0
    %732 = vmatpush1.bf16.msra.mxu0 %v524
    %733 = vmatprep.subr.bf16.mxu0 0
    %734 = vmatpush1.bf16.msra.mxu0 %v525
    %735 = vmatprep.subr.bf16.mxu0 0
    %736 = vmatpush1.bf16.msra.mxu0 %v526
    %737 = vmatprep.subr.bf16.mxu0 0
    %738 = vmatpush1.bf16.msra.mxu0 %v527
    %739 = vmatprep.subr.bf16.mxu0 0
    %740 = vmatpush1.bf16.msra.mxu0 %v528
    %741 = vmatprep.subr.bf16.mxu0 0
    %742 = vmatpush1.bf16.msra.mxu0 %v529
    %743 = vmatprep.subr.bf16.mxu0 0
    %744 = vmatpush1.bf16.msra.mxu0 %v530
    %745 = vmatprep.subr.bf16.mxu0 0
    %746 = vmatpush1.bf16.msra.mxu0 %v531
    %747 = vmatprep.subr.bf16.mxu0 0
    %748 = vmatpush1.bf16.msra.mxu0 %v532
    %749 = vmatprep.mubr.bf16.mxu0 %v204
    %750 = vmatmul.mubr.bf16.gmra.mrb[0].mxu0 %v203
    %v751 = vpop.f32.mrb[0].mxu0
    %v752 = vadd.f32 %v712, %v751
    %v753 = vpop.f32.mrb[0].mxu0
    %v754 = vpop.f32.mrb[0].mxu0
    %v755 = vpop.f32.mrb[0].mxu0
    %756 = vdwg.mxu0
    %v757 = vadd.f32 %v180, %v752
    %758 = vst [vmem:[#allocation7] sm:$0xff] %v757
    // Predicated region
    $region26: #{tpu_custom_call.1} parent=1 // pred_check
      %p759 = pneg %p42
    $region27: #{tpu_custom_call.1} parent=1 // pred_check_branch
      %761 = sbr.rel (%p759) target = $region29
    $region28: #{tpu_custom_call.1} parent=1 // pred_region
      %v762 = vld [vmem:[#allocation7] sm:$0xff]
      %v763 = vld [vmem:[%s2] sm:$0x1]
      %v765 = vlaneseq
      %v766 = vshrl.u32 %v765, 7
      %v767 = vsub.s32 0, %v766
      %v768 = vrot.slane %v763, %v767
      %v770 = vadd.f32 %v762, %v768
      %771 = vmax.xlane.f32.xlu0 %v770
      %v772 = vpop.xlane.xlu0 %771
      %v773 = vsub.f32 %v770, %v772
      %v774 = vmul.f32 %v773, 1.442695
      %v775 = vpow.pop %v774
      %776 = vadd.xlane.f32.xlu0 %v775
      %v777 = vpop.xlane.xlu0 %776
      %v778 = vrcp.pop %v777
      %v779 = vmul.f32 %v775, %v778
      %780 = vst [vmem:[#allocation7] sm:$0xff] %v779
    $region29: #{tpu_custom_call.1} parent=1 // pred_fallthru
      _
    // Predicated region
    $region30: #{tpu_custom_call.1} parent=1 // pred_check
      _
    $region31: #{tpu_custom_call.1} parent=1 // pred_check_branch
      %782 = sbr.rel (0) target = $region33
    $region32: #{tpu_custom_call.1} parent=1 // pred_region
      %s784 = ssub.s32 128, 128
      %785 = vsyncadd [#allocation4], %s784
      %s787 = sshll.u32 [#allocation7], 4
      %s788 = int_to_ptr.vmem [resolvable:$true] %s787
      %790 = dma.vmem_to_hbm [thread:$0]  %s788, 128, %s3, [#allocation4]
    $region33: #{tpu_custom_call.1} parent=1 // pred_fallthru
      _
    // Predicated region
    $region34: #{tpu_custom_call.1} parent=1 // pred_check
      _
    $region35: #{tpu_custom_call.1} parent=1 // pred_check_branch
      %792 = sbr.rel (0) target = $region37
    $region36: #{tpu_custom_call.1} parent=1 // pred_region
      %793 = dma.done [#allocation4], 128
    $region37: #{tpu_custom_call.1} parent=1 // pred_fallthru
      _
    %794 = vsyncpa [#allocation3], 1
    %795 = vsyncpa [#allocation6], 1
    %796 = vsyncpa [#allocation4], 1

</llo_original>
